<compile_context>
chip_gen: v6e
topology: v6e:2x2x1
jax: 0.10.0
libtpu: 0.0.40
codegen_flags: <defaults>
</compile_context>

<pallas_src>
import functools

import jax
import jax.numpy as jnp
from jax.experimental import pallas as pl
from jax.experimental.pallas import tpu as pltpu

HIDDEN_SIZE = 30
LANE = 128


def _round_up(n, m):
    return ((n + m - 1) // m) * m


def _mlp_softmax_kernel(x_ref, w1_ref, b1_ref, w2_ref, b2_ref, w3_ref, b3_ref,
                        o_ref):
    """Fused transposed 3-layer MLP (relu, relu, linear) + softmax.

    All tiles are (features, batch_tile): batch on the lane axis -> lane-dense.
    Weights are PyTorch-native (out_features, in_features); biases (out, 1).
    """
    x = x_ref[...]                                                    # (in, TM) bf16

    # f1 + relu (MXU bf16, f32 accumulate; elementwise in f32)
    h1 = jnp.dot(w1_ref[...], x, preferred_element_type=jnp.float32)  # (H, TM)
    h1 = jnp.maximum(h1 + b1_ref[...], 0.0)

    # f2 + relu
    h2 = jnp.dot(w2_ref[...], h1.astype(jnp.bfloat16),
                 preferred_element_type=jnp.float32)                  # (H, TM)
    h2 = jnp.maximum(h2 + b2_ref[...], 0.0)

    # f3 (no activation)
    logits = jnp.dot(w3_ref[...], h2.astype(jnp.bfloat16),
                     preferred_element_type=jnp.float32)              # (out, TM)
    logits = logits + b3_ref[...]

    # softmax over the class axis (axis 0 here == dim=1 of the (B, out) view)
    m = jnp.max(logits, axis=0, keepdims=True)
    e = jnp.exp(logits - m)
    denom = jnp.sum(e, axis=0, keepdims=True)
    o_ref[...] = (e * pl.reciprocal(denom, approx=True)).astype(o_ref.dtype)


@functools.partial(jax.jit, static_argnames=("tm",))
def dqfd_forward(x, params, tm=512):
    """x: (B, in_size) f32. params: PyTorch-layout weights. Returns (B, out_size) f32."""
    B, in_size = x.shape
    hidden = params["w1"].shape[0]
    out_size = params["w3"].shape[0]

    # Batch tile: multiple of 128 (lane axis), capped at `tm`; pad B up to it.
    tm = min(tm, _round_up(B, LANE))
    bp = _round_up(B, tm)
    grid = (bp // tm,)

    # Lane-dense bf16 input slab (in_size, B_padded); zero-padded tail columns
    # produce harmless softmax outputs that are sliced off below.
    xt = jnp.zeros((in_size, bp), jnp.bfloat16).at[:, :B].set(
        x.T.astype(jnp.bfloat16))

    w1 = params["w1"].astype(jnp.bfloat16)
    w2 = params["w2"].astype(jnp.bfloat16)
    w3 = params["w3"].astype(jnp.bfloat16)
    b1, b2, b3 = params["b1"], params["b2"], params["b3"]

    def const(shape):  # full-array block, resident across all grid steps
        return pl.BlockSpec(shape, lambda i: (0, 0))

    out_t = pl.pallas_call(
        _mlp_softmax_kernel,
        out_shape=jax.ShapeDtypeStruct((out_size, bp), jnp.float32),
        grid=grid,
        in_specs=[
            pl.BlockSpec((in_size, tm), lambda i: (0, i)),   # x streams by tile
            const((hidden, in_size)),                        # w1
            const((hidden, 1)),                              # b1
            const((hidden, hidden)),                         # w2
            const((hidden, 1)),                              # b2
            const((out_size, hidden)),                       # w3
            const((out_size, 1)),                            # b3
        ],
        out_specs=pl.BlockSpec((out_size, tm), lambda i: (0, i)),
        compiler_params=pltpu.CompilerParams(
            dimension_semantics=("parallel",)),  # megacore split on v7x; no-op v5e/v6e
    )(xt, w1, b1, w2, b2, w3, b3)

    return out_t[:, :B].T


def xavier_uniform(key, out_features, in_features):
    """Matches nn.init.xavier_uniform_ (gain=1) on a (out, in) weight."""
    bound = (6.0 / (in_features + out_features)) ** 0.5
    return jax.random.uniform(key, (out_features, in_features), jnp.float32,
                              minval=-bound, maxval=bound)


def init_params(key, in_size, out_size, hidden=HIDDEN_SIZE):
    ks = jax.random.split(key, 6)

    # nn.Linear bias ~ U(-1/sqrt(fan_in), 1/sqrt(fan_in)); stored (out, 1) for
    # the transposed (features, batch) kernel layout.
    def bias(k, fan_in, n):
        b = 1.0 / (fan_in ** 0.5)
        return jax.random.uniform(k, (n, 1), jnp.float32, minval=-b, maxval=b)

    return {
        "w1": xavier_uniform(ks[0], hidden, in_size),
        "b1": bias(ks[3], in_size, hidden),
        "w2": xavier_uniform(ks[1], hidden, hidden),
        "b2": bias(ks[4], hidden, hidden),
        "w3": xavier_uniform(ks[2], out_size, hidden),
        "b3": bias(ks[5], hidden, out_size),
    }
    # TODO(synk): Adam optimizer / MSELoss from the original module are training
    # state, not part of the forward pass, and are intentionally not ported.


if __name__ == "__main__":
    key = jax.random.PRNGKey(0)
    k_x, k_p = jax.random.split(key)

    # Small shapes consistent with a DQfD state/action setup.
    batch, in_size, out_size = 2, 4, 2

    x = jax.random.normal(k_x, (batch, in_size), jnp.float32)
    params = init_params(k_p, in_size, out_size)

    out = dqfd_forward(x, params)
    out = jax.block_until_ready(out)

    # sanity: correct shape, finite, non-negative, softmax rows sum to ~1
    # (tolerance accounts for bf16 MXU inputs + approx EUP reciprocal)
    assert out.shape == (batch, out_size)
    assert bool(jnp.all(jnp.isfinite(out)))
    assert bool(jnp.all(out >= 0.0))
    assert bool(jnp.all(jnp.abs(jnp.sum(out, axis=-1) - 1.0) < 1e-2))

    print("KERNEL_OK")
</pallas_src>

<mosaic_0001>
module attributes {stable_mosaic.version = 11 : i64} {
  func.func @_mlp_softmax_kernel(%arg0: i32, %arg1: memref<4x128xbf16, #tpu.memory_space<vmem>>, %arg2: memref<30x4xbf16, #tpu.memory_space<vmem>>, %arg3: memref<30x1xf32, #tpu.memory_space<vmem>>, %arg4: memref<30x30xbf16, #tpu.memory_space<vmem>>, %arg5: memref<30x1xf32, #tpu.memory_space<vmem>>, %arg6: memref<2x30xbf16, #tpu.memory_space<vmem>>, %arg7: memref<2x1xf32, #tpu.memory_space<vmem>>, %arg8: memref<2x128xf32, #tpu.memory_space<vmem>>) attributes {dimension_semantics = [#tpu.dimension_semantics<parallel>], iteration_bounds = array<i64: 1>, scalar_prefetch = 0 : i64, scratch_operands = 0 : i64, tpu.core_type = #tpu.core_type<tc>, window_params = [{transform_indices = @transform_0, window_bounds = array<i64: 4, 128>}, {pipeline_mode = #tpu.pipeline_mode<synchronous>, transform_indices = @transform_1, window_bounds = array<i64: 30, 4>}, {pipeline_mode = #tpu.pipeline_mode<synchronous>, transform_indices = @transform_2, window_bounds = array<i64: 30, 1>}, {pipeline_mode = #tpu.pipeline_mode<synchronous>, transform_indices = @transform_3, window_bounds = array<i64: 30, 30>}, {pipeline_mode = #tpu.pipeline_mode<synchronous>, transform_indices = @transform_4, window_bounds = array<i64: 30, 1>}, {pipeline_mode = #tpu.pipeline_mode<synchronous>, transform_indices = @transform_5, window_bounds = array<i64: 2, 30>}, {pipeline_mode = #tpu.pipeline_mode<synchronous>, transform_indices = @transform_6, window_bounds = array<i64: 2, 1>}, {transform_indices = @transform_7, window_bounds = array<i64: 2, 128>}]} {
    %c0 = arith.constant 0 : index
    %c0_0 = arith.constant 0 : index
    %0 = vector.load %arg1[%c0, %c0_0] : memref<4x128xbf16, #tpu.memory_space<vmem>>, vector<4x128xbf16>
    %c0_1 = arith.constant 0 : index
    %c0_2 = arith.constant 0 : index
    %1 = vector.load %arg2[%c0_1, %c0_2] : memref<30x4xbf16, #tpu.memory_space<vmem>>, vector<30x4xbf16>
    %cst = arith.constant dense<0.000000e+00> : vector<30x128xf32>
    %2 = tpu.matmul %1, %0, %cst {dimension_numbers = #tpu.dot_dimension_numbers<[1], [0], [0], [1], [0, 0, 1, 1], [], []>} : vector<30x4xbf16>, vector<4x128xbf16>, vector<30x128xf32> -> vector<30x128xf32>
    %c0_3 = arith.constant 0 : index
    %c0_4 = arith.constant 0 : index
    %3 = vector.load %arg3[%c0_3, %c0_4] : memref<30x1xf32, #tpu.memory_space<vmem>>, vector<30x1xf32>
    %4 = vector.broadcast %3 : vector<30x1xf32> to vector<30x128xf32>
    %5 = arith.addf %2, %4 : vector<30x128xf32>
    %cst_5 = arith.constant 0.000000e+00 : f32
    %6 = vector.broadcast %cst_5 : f32 to vector<30x128xf32>
    %7 = arith.maximumf %5, %6 : vector<30x128xf32>
    %c0_6 = arith.constant 0 : index
    %c0_7 = arith.constant 0 : index
    %8 = vector.load %arg4[%c0_6, %c0_7] : memref<30x30xbf16, #tpu.memory_space<vmem>>, vector<30x30xbf16>
    %9 = arith.truncf %7 : vector<30x128xf32> to vector<30x128xbf16>
    %cst_8 = arith.constant dense<0.000000e+00> : vector<30x128xf32>
    %10 = tpu.matmul %8, %9, %cst_8 {dimension_numbers = #tpu.dot_dimension_numbers<[1], [0], [0], [1], [0, 0, 1, 1], [], []>} : vector<30x30xbf16>, vector<30x128xbf16>, vector<30x128xf32> -> vector<30x128xf32>
    %c0_9 = arith.constant 0 : index
    %c0_10 = arith.constant 0 : index
    %11 = vector.load %arg5[%c0_9, %c0_10] : memref<30x1xf32, #tpu.memory_space<vmem>>, vector<30x1xf32>
    %12 = vector.broadcast %11 : vector<30x1xf32> to vector<30x128xf32>
    %13 = arith.addf %10, %12 : vector<30x128xf32>
    %cst_11 = arith.constant 0.000000e+00 : f32
    %14 = vector.broadcast %cst_11 : f32 to vector<30x128xf32>
    %15 = arith.maximumf %13, %14 : vector<30x128xf32>
    %c0_12 = arith.constant 0 : index
    %c0_13 = arith.constant 0 : index
    %16 = vector.load %arg6[%c0_12, %c0_13] : memref<2x30xbf16, #tpu.memory_space<vmem>>, vector<2x30xbf16>
    %17 = arith.truncf %15 : vector<30x128xf32> to vector<30x128xbf16>
    %cst_14 = arith.constant dense<0.000000e+00> : vector<2x128xf32>
    %18 = tpu.matmul %16, %17, %cst_14 {dimension_numbers = #tpu.dot_dimension_numbers<[1], [0], [0], [1], [0, 0, 1, 1], [], []>} : vector<2x30xbf16>, vector<30x128xbf16>, vector<2x128xf32> -> vector<2x128xf32>
    %c0_15 = arith.constant 0 : index
    %c0_16 = arith.constant 0 : index
    %19 = vector.load %arg7[%c0_15, %c0_16] : memref<2x1xf32, #tpu.memory_space<vmem>>, vector<2x1xf32>
    %20 = vector.broadcast %19 : vector<2x1xf32> to vector<2x128xf32>
    %21 = arith.addf %18, %20 : vector<2x128xf32>
    %cst_17 = arith.constant dense<0xFF800000> : vector<128xf32>
    %22 = vector.multi_reduction <maximumf>, %21, %cst_17 [0] : vector<2x128xf32> to vector<128xf32>
    %23 = vector.shape_cast %22 : vector<128xf32> to vector<1x128xf32>
    %24 = vector.broadcast %23 : vector<1x128xf32> to vector<2x128xf32>
    %25 = arith.subf %21, %24 : vector<2x128xf32>
    %26 = math.exp %25 : vector<2x128xf32>
    %cst_18 = arith.constant dense<0.000000e+00> : vector<128xf32>
    %27 = vector.multi_reduction <add>, %26, %cst_18 [0] : vector<2x128xf32> to vector<128xf32>
    %28 = vector.shape_cast %27 : vector<128xf32> to vector<1x128xf32>
    %29 = tpu.reciprocal %28 {approx = true} : vector<1x128xf32> -> vector<1x128xf32>
    %30 = vector.broadcast %29 : vector<1x128xf32> to vector<2x128xf32>
    %31 = arith.mulf %26, %30 : vector<2x128xf32>
    %c0_19 = arith.constant 0 : index
    %c0_20 = arith.constant 0 : index
    %32 = vector.load %arg8[%c0_19, %c0_20] : memref<2x128xf32, #tpu.memory_space<vmem>>, vector<2x128xf32>
    tpu.vector_store %arg8[%c0_19, %c0_20], %31 {strides = array<i32>} : memref<2x128xf32, #tpu.memory_space<vmem>>, vector<2x128xf32>,
    return
  }
  func.func @transform_0(%arg0: i32) -> (i32, i32) {
    %c0_i32 = arith.constant 0 : i32
    %c0_i32_0 = arith.constant 0 : i32
    return %c0_i32, %arg0 : i32, i32
  }
  func.func @transform_1(%arg0: i32) -> (i32, i32) {
    %c0_i32 = arith.constant 0 : i32
    %c0_i32_0 = arith.constant 0 : i32
    %c0_i32_1 = arith.constant 0 : i32
    return %c0_i32, %c0_i32_0 : i32, i32
  }
  func.func @transform_2(%arg0: i32) -> (i32, i32) {
    %c0_i32 = arith.constant 0 : i32
    %c0_i32_0 = arith.constant 0 : i32
    %c0_i32_1 = arith.constant 0 : i32
    return %c0_i32, %c0_i32_0 : i32, i32
  }
  func.func @transform_3(%arg0: i32) -> (i32, i32) {
    %c0_i32 = arith.constant 0 : i32
    %c0_i32_0 = arith.constant 0 : i32
    %c0_i32_1 = arith.constant 0 : i32
    return %c0_i32, %c0_i32_0 : i32, i32
  }
  func.func @transform_4(%arg0: i32) -> (i32, i32) {
    %c0_i32 = arith.constant 0 : i32
    %c0_i32_0 = arith.constant 0 : i32
    %c0_i32_1 = arith.constant 0 : i32
    return %c0_i32, %c0_i32_0 : i32, i32
  }
  func.func @transform_5(%arg0: i32) -> (i32, i32) {
    %c0_i32 = arith.constant 0 : i32
    %c0_i32_0 = arith.constant 0 : i32
    %c0_i32_1 = arith.constant 0 : i32
    return %c0_i32, %c0_i32_0 : i32, i32
  }
  func.func @transform_6(%arg0: i32) -> (i32, i32) {
    %c0_i32 = arith.constant 0 : i32
    %c0_i32_0 = arith.constant 0 : i32
    %c0_i32_1 = arith.constant 0 : i32
    return %c0_i32, %c0_i32_0 : i32, i32
  }
  func.func @transform_7(%arg0: i32) -> (i32, i32) {
    %c0_i32 = arith.constant 0 : i32
    %c0_i32_0 = arith.constant 0 : i32
    return %c0_i32, %arg0 : i32, i32
  }
}

</mosaic_0001>

<llo_original>
// kernel: dqfd_forward.1
$region0: #{dqfd_forward.1}
  #allocation0 [shape = 'u32[]', space=smem, size = 0x4, offset = 0x4, fixed_abs, tag = 'smem constant byte address 0x4 - core index']
  #allocation1 [shape = 'u32[144,128]{1,0:T(1,128)}', space=vmem, size = 0x12000, scoped, tag = 'internal scratch']
  %s0 = inlined_call_operand.vmem [shape: bf16[4,128], index: 0, kind: input, shape index: {}]
  %s1 = inlined_call_operand.vmem [shape: bf16[30,4], index: 1, kind: input, shape index: {}]
  %s2 = inlined_call_operand.vmem [shape: f32[30,1], index: 2, kind: input, shape index: {}]
  %s3 = inlined_call_operand.vmem [shape: bf16[30,30], index: 3, kind: input, shape index: {}]
  %s4 = inlined_call_operand.vmem [shape: f32[30,1], index: 4, kind: input, shape index: {}]
  %s5 = inlined_call_operand.vmem [shape: bf16[2,30], index: 5, kind: input, shape index: {}]
  %s6 = inlined_call_operand.vmem [shape: f32[2,1], index: 6, kind: input, shape index: {}]
  %s7 = inlined_call_operand.vmem [shape: f32[2,128], index: 7, kind: output, shape index: {}]
  %s8 = sld [smem:[#allocation0]]
  $region38: #{dqfd_forward.1} parent=0
    _
  %s10 = ssub.s32 1, %s8
  %s11 = scalar_select 0, %s10, %s8
  // Predicated region
  $region2: #{dqfd_forward.1} parent=0 // pred_check
    _
  $region3: #{dqfd_forward.1} parent=0 // pred_check_branch
    %13 = sbr.rel (0) target = $region5
  $region4: #{dqfd_forward.1} parent=0 // pred_region
    _
  $region5: #{dqfd_forward.1} parent=0 // pred_fallthru
    _
  // Predicated region
  $region6: #{dqfd_forward.1} parent=0 // pred_check
    _
  $region7: #{dqfd_forward.1} parent=0 // pred_check_branch
    %15 = sbr.rel (0) target = $region9
  $region8: #{dqfd_forward.1} parent=0 // pred_region
    _
  $region9: #{dqfd_forward.1} parent=0 // pred_fallthru
    _
  // Predicated region
  $region10: #{dqfd_forward.1} parent=0 // pred_check
    _
  $region11: #{dqfd_forward.1} parent=0 // pred_check_branch
    %17 = sbr.rel (0) target = $region13
  $region12: #{dqfd_forward.1} parent=0 // pred_region
    _
  $region13: #{dqfd_forward.1} parent=0 // pred_fallthru
    _
  // Predicated region
  $region14: #{dqfd_forward.1} parent=0 // pred_check
    _
  $region15: #{dqfd_forward.1} parent=0 // pred_check_branch
    %19 = sbr.rel (0) target = $region17
  $region16: #{dqfd_forward.1} parent=0 // pred_region
    _
  $region17: #{dqfd_forward.1} parent=0 // pred_fallthru
    _
  // Predicated region
  $region18: #{dqfd_forward.1} parent=0 // pred_check
    _
  $region19: #{dqfd_forward.1} parent=0 // pred_check_branch
    %21 = sbr.rel (0) target = $region21
  $region20: #{dqfd_forward.1} parent=0 // pred_region
    _
  $region21: #{dqfd_forward.1} parent=0 // pred_fallthru
    _
  // Predicated region
  $region22: #{dqfd_forward.1} parent=0 // pred_check
    _
  $region23: #{dqfd_forward.1} parent=0 // pred_check_branch
    %23 = sbr.rel (0) target = $region25
  $region24: #{dqfd_forward.1} parent=0 // pred_region
    _
  $region25: #{dqfd_forward.1} parent=0 // pred_fallthru
    _
  // Predicated region
  $region26: #{dqfd_forward.1} parent=0 // pred_check
    _
  $region27: #{dqfd_forward.1} parent=0 // pred_check_branch
    %25 = sbr.rel (0) target = $region29
  $region28: #{dqfd_forward.1} parent=0 // pred_region
    _
  $region29: #{dqfd_forward.1} parent=0 // pred_fallthru
    _
  %v27 = vld [vmem:[%s0] sm:$0x3]
  %v28 = vld [vmem:[%s1] sm:$0xf]
  %v29 = vld [vmem:[%s1 + $0x4] sm:$0xf]
  %v30 = vld [vmem:[%s1 + $0x8] sm:$0xf]
  %v31 = vld [vmem:[%s1 + $0xc] sm:$0x7]
  %v32 = vld [vmem:[%s2] sm:$0xff]
  %v33 = vld [vmem:[%s2 + $0x8] sm:$0xff]
  %v34 = vld [vmem:[%s2 + $0x10] sm:$0xff]
  %v35 = vld [vmem:[%s2 + $0x18] sm:$0x3f]
  %37 = vset.pattern.permute.xlu0 0
  %38 = vperm.xlu0 %37, %v32
  %v39 = vpop.permute.xlu0 %38
  %42 = vset.pattern.permute.xlu0 0
  %43 = vperm.xlu0 %42, %v33
  %v44 = vpop.permute.xlu0 %43
  %47 = vset.pattern.permute.xlu0 0
  %48 = vperm.xlu0 %47, %v34
  %v49 = vpop.permute.xlu0 %48
  %52 = vset.pattern.permute.xlu0 0
  %53 = vperm.xlu0 %52, %v35
  %v54 = vpop.permute.xlu0 %53
  %v60 = vunpack.c.l.b16 %v28
  %v61 = vunpack.c.l.b16 %v29
  %v62 = vunpack.c.l.b16 %v30
  %v63 = vunpack.c.l.b16 %v31
  %v64 = vpack.c.b16 %v61, %v60
  %v65 = vpack.c.b16 %v63, %v62
  %vm66 = vcmask 31744
  %v68 = vsel %vm66, %v64, 0
  %v71 = vsel %vm66, %v65, 0
  %vm73 = vcmask 1041408
  %v75 = vsel %vm73, %v27, 0
  %77 = vmatprep.subr.bf16.mxu0 0
  %78 = vmatpush1.bf16.msra.mxu0 0
  %79 = vmatprep.subr.bf16.mxu0 0
  %80 = vmatpush1.bf16.msra.mxu0 0
  %81 = vmatprep.subr.bf16.mxu0 0
  %82 = vmatpush1.bf16.msra.mxu0 0
  %83 = vmatprep.subr.bf16.mxu0 0
  %84 = vmatpush1.bf16.msra.mxu0 0
  %85 = vmatprep.subr.bf16.mxu0 0
  %86 = vmatpush1.bf16.msra.mxu0 0
  %87 = vmatprep.subr.bf16.mxu0 0
  %88 = vmatpush1.bf16.msra.mxu0 0
  %89 = vmatprep.subr.bf16.mxu0 0
  %90 = vmatpush1.bf16.msra.mxu0 0
  %91 = vmatprep.subr.bf16.mxu0 0
  %92 = vmatpush1.bf16.msra.mxu0 %v75
  %93 = vmatprep.subr.bf16.mxu0 0
  %94 = vmatpush2.bf16.msra.mxu0 0
  %95 = vmatprep.subr.bf16.mxu0 0
  %96 = vmatpush2.bf16.msra.mxu0 0
  %97 = vmatprep.subr.bf16.mxu0 0
  %98 = vmatpush2.bf16.msra.mxu0 0
  %99 = vmatprep.subr.bf16.mxu0 0
  %100 = vmatpush2.bf16.msra.mxu0 0
  %101 = vmatprep.subr.bf16.mxu0 0
  %102 = vmatpush2.bf16.msra.mxu0 0
  %103 = vmatprep.subr.bf16.mxu0 0
  %104 = vmatpush2.bf16.msra.mxu0 0
  %105 = vmatprep.subr.bf16.mxu0 0
  %106 = vmatpush2.bf16.msra.mxu0 0
  %107 = vmatprep.subr.bf16.mxu0 0
  %108 = vmatpush2.bf16.msra.mxu0 0
  %109 = vmatprep.mubr.bf16.mxu0 0
  %110 = vmatmul.mubr.bf16.gmra.mxu0 %v68
  %v111 = vpop.f32.mrf.mxu0
  %v112 = vadd.f32 %v39, %v111
  %v113 = vpop.f32.mrf.mxu0
  %v114 = vpop.f32.mrf.mxu0
  %v115 = vadd.f32 %v44, %v114
  %v116 = vpop.f32.mrf.mxu0
  %117 = vmatprep.mubr.bf16.mxu0 0
  %118 = vmatmul.mubr.bf16.gmra.mxu0 %v71
  %v119 = vpop.f32.mrf.mxu0
  %v120 = vadd.f32 %v49, %v119
  %v121 = vpop.f32.mrf.mxu0
  %v122 = vpop.f32.mrf.mxu0
  %v123 = vadd.f32 %v54, %v122
  %v124 = vpop.f32.mrf.mxu0
  %125 = vdwg.mxu0
  %v126 = vmax.f32 %v112, 0.0
  %v127 = vmax.f32 %v115, 0.0
  %v128 = vmax.f32 %v120, 0.0
  %v129 = vmax.f32 %v123, 0.0
  %v130 = vld [vmem:[%s3] sm:$0xf]
  %v131 = vld [vmem:[%s3 + $0x4] sm:$0xf]
  %v132 = vld [vmem:[%s3 + $0x8] sm:$0xf]
  %v133 = vld [vmem:[%s3 + $0xc] sm:$0x7]
  %v134 = vpack.c.bf16 %v127, %v126
  %v135 = vpack.c.bf16 %v129, %v128
  %v136 = vld [vmem:[%s4] sm:$0xff]
  %v137 = vld [vmem:[%s4 + $0x8] sm:$0xff]
  %v138 = vld [vmem:[%s4 + $0x10] sm:$0xff]
  %v139 = vld [vmem:[%s4 + $0x18] sm:$0x3f]
  %141 = vset.pattern.permute.xlu0 0
  %142 = vperm.xlu0 %141, %v136
  %v143 = vpop.permute.xlu0 %142
  %146 = vset.pattern.permute.xlu0 0
  %147 = vperm.xlu0 %146, %v137
  %v148 = vpop.permute.xlu0 %147
  %151 = vset.pattern.permute.xlu0 0
  %152 = vperm.xlu0 %151, %v138
  %v153 = vpop.permute.xlu0 %152
  %156 = vset.pattern.permute.xlu0 0
  %157 = vperm.xlu0 %156, %v139
  %v158 = vpop.permute.xlu0 %157
  %v164 = vunpack.c.l.b16 %v130
  %v165 = vunpack.c.l.b16 %v131
  %v166 = vunpack.c.l.b16 %v132
  %v167 = vunpack.c.l.b16 %v133
  %v168 = vpack.c.b16 %v165, %v164
  %v169 = vpack.c.b16 %v167, %v166
  %vm170 = vcmask 244736
  %v172 = vsel %vm170, %v168, 0
  %v175 = vsel %vm170, %v169, 0
  %vm177 = vcmask 1046528
  %v179 = vsel %vm177, %v135, 0
  %181 = vmatprep.subr.bf16.mxu0 0
  %182 = vmatpush1.bf16.msra.mxu0 0
  %183 = vmatprep.subr.bf16.mxu0 0
  %184 = vmatpush1.bf16.msra.mxu0 0
  %185 = vmatprep.subr.bf16.mxu0 0
  %186 = vmatpush1.bf16.msra.mxu0 0
  %187 = vmatprep.subr.bf16.mxu0 0
  %188 = vmatpush1.bf16.msra.mxu0 0
  %189 = vmatprep.subr.bf16.mxu0 0
  %190 = vmatpush1.bf16.msra.mxu0 0
  %191 = vmatprep.subr.bf16.mxu0 0
  %192 = vmatpush1.bf16.msra.mxu0 0
  %193 = vmatprep.subr.bf16.mxu0 0
  %194 = vmatpush1.bf16.msra.mxu0 %v179
  %195 = vmatprep.subr.bf16.mxu0 0
  %196 = vmatpush1.bf16.msra.mxu0 %v134
  %197 = vmatprep.subr.bf16.mxu0 0
  %198 = vmatpush2.bf16.msra.mxu0 0
  %199 = vmatprep.subr.bf16.mxu0 0
  %200 = vmatpush2.bf16.msra.mxu0 0
  %201 = vmatprep.subr.bf16.mxu0 0
  %202 = vmatpush2.bf16.msra.mxu0 0
  %203 = vmatprep.subr.bf16.mxu0 0
  %204 = vmatpush2.bf16.msra.mxu0 0
  %205 = vmatprep.subr.bf16.mxu0 0
  %206 = vmatpush2.bf16.msra.mxu0 0
  %207 = vmatprep.subr.bf16.mxu0 0
  %208 = vmatpush2.bf16.msra.mxu0 0
  %209 = vmatprep.subr.bf16.mxu0 0
  %210 = vmatpush2.bf16.msra.mxu0 0
  %211 = vmatprep.subr.bf16.mxu0 0
  %212 = vmatpush2.bf16.msra.mxu0 0
  %213 = vmatprep.mubr.bf16.mxu0 0
  %214 = vmatmul.mubr.bf16.gmra.mxu0 %v172
  %v215 = vpop.f32.mrf.mxu0
  %v216 = vadd.f32 %v143, %v215
  %v217 = vpop.f32.mrf.mxu0
  %v218 = vpop.f32.mrf.mxu0
  %v219 = vadd.f32 %v148, %v218
  %v220 = vpop.f32.mrf.mxu0
  %221 = vmatprep.mubr.bf16.mxu0 0
  %222 = vmatmul.mubr.bf16.gmra.mxu0 %v175
  %v223 = vpop.f32.mrf.mxu0
  %v224 = vadd.f32 %v153, %v223
  %v225 = vpop.f32.mrf.mxu0
  %v226 = vpop.f32.mrf.mxu0
  %v227 = vadd.f32 %v158, %v226
  %v228 = vpop.f32.mrf.mxu0
  %229 = vdwg.mxu0
  %v230 = vmax.f32 %v216, 0.0
  %v231 = vmax.f32 %v219, 0.0
  %v232 = vmax.f32 %v224, 0.0
  %v233 = vmax.f32 %v227, 0.0
  %v234 = vld [vmem:[%s5] sm:$0x1]
  %v235 = vpack.c.bf16 %v231, %v230
  %v236 = vpack.c.bf16 %v233, %v232
  %v237 = vld [vmem:[%s6] sm:$0x3]
  %239 = vset.pattern.permute.xlu0 0
  %240 = vperm.xlu0 %239, %v237
  %v241 = vpop.permute.xlu0 %240
  %v244 = vsel %vm170, %v234, 0
  %v247 = vsel %vm177, %v236, 0
  %249 = vmatprep.subr.bf16.mxu0 0
  %250 = vmatpush1.bf16.msra.mxu0 0
  %251 = vmatprep.subr.bf16.mxu0 0
  %252 = vmatpush1.bf16.msra.mxu0 0
  %253 = vmatprep.subr.bf16.mxu0 0
  %254 = vmatpush1.bf16.msra.mxu0 0
  %255 = vmatprep.subr.bf16.mxu0 0
  %256 = vmatpush1.bf16.msra.mxu0 0
  %257 = vmatprep.subr.bf16.mxu0 0
  %258 = vmatpush1.bf16.msra.mxu0 0
  %259 = vmatprep.subr.bf16.mxu0 0
  %260 = vmatpush1.bf16.msra.mxu0 0
  %261 = vmatprep.subr.bf16.mxu0 0
  %262 = vmatpush1.bf16.msra.mxu0 %v247
  %263 = vmatprep.subr.bf16.mxu0 0
  %264 = vmatpush1.bf16.msra.mxu0 %v235
  %265 = vmatprep.subr.bf16.mxu0 0
  %266 = vmatpush2.bf16.msra.mxu0 0
  %267 = vmatprep.subr.bf16.mxu0 0
  %268 = vmatpush2.bf16.msra.mxu0 0
  %269 = vmatprep.subr.bf16.mxu0 0
  %270 = vmatpush2.bf16.msra.mxu0 0
  %271 = vmatprep.subr.bf16.mxu0 0
  %272 = vmatpush2.bf16.msra.mxu0 0
  %273 = vmatprep.subr.bf16.mxu0 0
  %274 = vmatpush2.bf16.msra.mxu0 0
  %275 = vmatprep.subr.bf16.mxu0 0
  %276 = vmatpush2.bf16.msra.mxu0 0
  %277 = vmatprep.subr.bf16.mxu0 0
  %278 = vmatpush2.bf16.msra.mxu0 0
  %279 = vmatprep.subr.bf16.mxu0 0
  %280 = vmatpush2.bf16.msra.mxu0 0
  %281 = vmatprep.mubr.bf16.mxu0 0
  %282 = vmatmul.mubr.bf16.gmra.mxu0 %v244
  %v283 = vpop.f32.mrf.mxu0
  %v284 = vadd.f32 %v241, %v283
  %v285 = vpop.f32.mrf.mxu0
  %v286 = vpop.f32.mrf.mxu0
  %v287 = vpop.f32.mrf.mxu0
  %288 = vdwg.mxu0
  %v289 = vsel %vm73, %v284, -inf
  %v290 = vrot.slane %v289, 4
  %v291 = vmax.f32 %v289, %v290
  %v292 = vrot.slane %v291, 2
  %v293 = vmax.f32 %v291, %v292
  %v294 = vrot.slane %v293, 1
  %v295 = vmax.f32 %v293, %v294
  %v296 = vsub.f32 %v284, %v295
  %v297 = vmul.f32 %v296, 1.442695
  %v298 = vpow.pop %v297
  %v299 = vsel %vm73, %v298, 0.0
  %v300 = vrot.slane %v299, 4
  %v301 = vadd.f32 %v299, %v300
  %v302 = vrot.slane %v301, 2
  %v303 = vadd.f32 %v301, %v302
  %v304 = vrot.slane %v303, 1
  %v305 = vadd.f32 %v303, %v304
  %v306 = vrcp.pop %v305
  %v307 = vmul.f32 %v298, %v306
  %308 = vst [vmem:[%s7] sm:$0x3] %v307
  // Predicated region
  $region30: #{dqfd_forward.1} parent=0 // pred_check
    _
  $region31: #{dqfd_forward.1} parent=0 // pred_check_branch
    %310 = sbr.rel (0) target = $region33
  $region32: #{dqfd_forward.1} parent=0 // pred_region
    _
  $region33: #{dqfd_forward.1} parent=0 // pred_fallthru
    _
  // Predicated region
  $region34: #{dqfd_forward.1} parent=0 // pred_check
    _
  $region35: #{dqfd_forward.1} parent=0 // pred_check_branch
    %312 = sbr.rel (0) target = $region37
  $region36: #{dqfd_forward.1} parent=0 // pred_region
    _
  $region37: #{dqfd_forward.1} parent=0 // pred_fallthru
    _

</llo_original>
